<compile_context>
chip_gen: v7x
topology: tpu7x:2x2x1
jax: 0.10.0
libtpu: 0.0.40
codegen_flags: <defaults>
</compile_context>

<pallas_src>
import jax
import jax.numpy as jnp
from jax.experimental import pallas as pl
from jax.experimental.pallas import tpu as pltpu

IN_FEATURES = 28 * 28   # 784 (multiple of 8 -> valid contraction dim, no K-pad)
HIDDEN = 64
HIDDEN_PAD = 128        # lane-dense hidden width
N_CLASSES = 10
OUT_PAD = 128           # lane-dense class width -> unmasked vst


def _round_up(n, m):
    return ((n + m - 1) // m) * m


def mlp_kernel(x_ref,
               w1_ref, b1_ref,
               w2_ref, b2_ref,
               w3_ref, b3_ref,
               w4_ref, b4_ref,
               o_ref):
    """One batch tile of fc1->relu->fc2->relu->fc3->relu->fc4->log_softmax."""
    # x arrives f32 straight from HBM (no host-side pad/cast pass); the bf16
    # cast for the MXU happens here, free VPU filler on a mem-bound kernel.
    x = x_ref[...].astype(jnp.bfloat16)

    h = jnp.dot(x, w1_ref[...], preferred_element_type=jnp.float32) + b1_ref[...]
    h = jnp.maximum(h, 0.0)

    h = jnp.dot(h.astype(jnp.bfloat16), w2_ref[...],
                preferred_element_type=jnp.float32) + b2_ref[...]
    h = jnp.maximum(h, 0.0)

    h = jnp.dot(h.astype(jnp.bfloat16), w3_ref[...],
                preferred_element_type=jnp.float32) + b3_ref[...]
    h = jnp.maximum(h, 0.0)

    logits = jnp.dot(h.astype(jnp.bfloat16), w4_ref[...],
                     preferred_element_type=jnp.float32) + b4_ref[...]

    # Mask padded class lanes so the logsumexp over the 10 real classes is exact.
    lane = jax.lax.broadcasted_iota(jnp.int32, logits.shape, 1)
    logits = jnp.where(lane < N_CLASSES, logits, -1e30)

    # Numerically stable log_softmax (f32 math), stored as bf16.
    m = jnp.max(logits, axis=-1, keepdims=True)
    shifted = logits - m
    lse = jnp.log(jnp.sum(jnp.exp(shifted), axis=-1, keepdims=True))
    o_ref[...] = (shifted - lse).astype(o_ref.dtype)


def prepare_params(params):
    """Zero-pad output dims to 128 lanes; weights -> bf16, biases stay f32.

    Note: ideally done once (not per call) when weights are static.
    """
    def pad(wb, in_dim, out_pad):
        w, b = wb
        fi, fo = w.shape
        wp = jnp.zeros((in_dim, out_pad), jnp.float32).at[:fi, :fo].set(w)
        bp = jnp.zeros((1, out_pad), jnp.float32).at[:, :fo].set(b.reshape(1, -1))
        return wp.astype(jnp.bfloat16), bp

    return (pad(params["fc1"], IN_FEATURES, HIDDEN_PAD),
            pad(params["fc2"], HIDDEN_PAD, HIDDEN_PAD),
            pad(params["fc3"], HIDDEN_PAD, HIDDEN_PAD),
            pad(params["fc4"], HIDDEN_PAD, OUT_PAD))


def net_forward(x, params, *, tb=2048, slice_output=True):
    """x: [B, 784] float32.  params: dict of (W[in,out], b[1,out]) per layer.

    Returns log-probs [B, 10] (bf16) if slice_output, else the padded
    [B, 128] kernel output (consumers that index classes directly can take the
    padded slab and skip the post-kernel slice pass).
    """
    B = x.shape[0]
    (w1, b1), (w2, b2), (w3, b3), (w4, b4) = prepare_params(params)

    # Batch tile: multiple of 16 (native bf16 sublane tile for the output);
    # collapses for tiny batches.  Grid handles a ragged last tile: the OOB
    # rows are undefined but all ops are row-wise and those rows are dropped.
    tb = min(tb, _round_up(B, 16))
    grid = (pl.cdiv(B, tb),)

    def weight_spec(shape):
        # Constant block index -> weights/biases stay VMEM-resident across steps.
        return pl.BlockSpec(shape, lambda i: (0, 0))

    weight_bytes = (IN_FEATURES * HIDDEN_PAD + 2 * HIDDEN_PAD * HIDDEN_PAD
                    + HIDDEN_PAD * OUT_PAD) * 2 + 4 * OUT_PAD * 4
    cost = pl.CostEstimate(
        flops=2 * B * (IN_FEATURES * HIDDEN_PAD + 2 * HIDDEN_PAD * HIDDEN_PAD
                       + HIDDEN_PAD * OUT_PAD),
        transcendentals=B * (OUT_PAD + 1),
        bytes_accessed=B * IN_FEATURES * 4 + B * OUT_PAD * 2 + weight_bytes,
    )

    out = pl.pallas_call(
        mlp_kernel,
        out_shape=jax.ShapeDtypeStruct((B, OUT_PAD), jnp.bfloat16),
        grid=grid,
        in_specs=[
            pl.BlockSpec((tb, IN_FEATURES), lambda i: (i, 0)),     # x, f32
            weight_spec((IN_FEATURES, HIDDEN_PAD)), weight_spec((1, HIDDEN_PAD)),
            weight_spec((HIDDEN_PAD, HIDDEN_PAD)), weight_spec((1, HIDDEN_PAD)),
            weight_spec((HIDDEN_PAD, HIDDEN_PAD)), weight_spec((1, HIDDEN_PAD)),
            weight_spec((HIDDEN_PAD, OUT_PAD)), weight_spec((1, OUT_PAD)),
        ],
        out_specs=pl.BlockSpec((tb, OUT_PAD), lambda i: (i, 0)),
        compiler_params=pltpu.CompilerParams(
            # Shards batch tiles across v7x's 2 TensorCores; no-op elsewhere.
            dimension_semantics=("parallel",),
            # Headroom for tb up to ~4096 with f32 x tiles; < v7x's 64 MiB VMEM.
            vmem_limit_bytes=48 * 1024 * 1024,
        ),
        cost_estimate=cost,
    )(x, w1, b1, w2, b2, w3, b3, w4, b4)

    if slice_output:
        return out[:B, :N_CLASSES]
    return out


def init_params(key):
    """Deterministic init; PyTorch nn.Linear weight is (out, in) — we store (in, out)."""
    def linear(key, fan_in, fan_out):
        kw, kb = jax.random.split(key)
        bound = 1.0 / jnp.sqrt(fan_in)
        w = jax.random.uniform(kw, (fan_in, fan_out), jnp.float32, -bound, bound)
        b = jax.random.uniform(kb, (1, fan_out), jnp.float32, -bound, bound)
        return w, b

    k1, k2, k3, k4 = jax.random.split(key, 4)
    return {
        "fc1": linear(k1, 28 * 28, 64),
        "fc2": linear(k2, 64, 64),
        "fc3": linear(k3, 64, 64),
        "fc4": linear(k4, 64, 10),
    }


if __name__ == "__main__":
    key = jax.random.PRNGKey(0)
    kx, kp = jax.random.split(key)

    # Small MNIST-like batch: [B, 1, 28, 28] (NCHW), flattened as in the module.
    B = 8
    x_img = jax.random.normal(kx, (B, 1, 28, 28), jnp.float32)
    x = x_img.reshape(-1, 28 * 28)  # x.view(-1, 28*28)

    params = init_params(kp)

    out = net_forward(x, params)
    out = jax.block_until_ready(out)

    # Reference mirrors the kernel's matmul precision (bf16 operands, f32
    # accumulate, f32 elementwise + log_softmax).  Zero-padding is exact.
    def ref(x, p):
        def lin(h, wb):
            w, b = wb
            return jnp.dot(h.astype(jnp.bfloat16), w.astype(jnp.bfloat16),
                           preferred_element_type=jnp.float32) + b
        h = jax.nn.relu(lin(x, p["fc1"]))
        h = jax.nn.relu(lin(h, p["fc2"]))
        h = jax.nn.relu(lin(h, p["fc3"]))
        logits = lin(h, p["fc4"])
        return jax.nn.log_softmax(logits, axis=1)

    expected = ref(x, params)
    assert out.shape == (B, 10), out.shape
    # Output is stored as bf16 (perf feedback): log-probs ~O(-2.3) carry a
    # half-ulp of ~8e-3, so the tolerance is widened accordingly.
    max_err = float(jnp.max(jnp.abs(out.astype(jnp.float32) - expected)))
    assert max_err < 3e-2, max_err

    print("KERNEL_OK")
</pallas_src>

<mosaic_0001>
module attributes {stable_mosaic.version = 11 : i64} {
  func.func @mlp_kernel(%arg0: i32, %arg1: memref<16x784xf32, #tpu.memory_space<vmem>>, %arg2: memref<784x128xbf16, #tpu.memory_space<vmem>>, %arg3: memref<1x128xf32, #tpu.memory_space<vmem>>, %arg4: memref<128x128xbf16, #tpu.memory_space<vmem>>, %arg5: memref<1x128xf32, #tpu.memory_space<vmem>>, %arg6: memref<128x128xbf16, #tpu.memory_space<vmem>>, %arg7: memref<1x128xf32, #tpu.memory_space<vmem>>, %arg8: memref<128x128xbf16, #tpu.memory_space<vmem>>, %arg9: memref<1x128xf32, #tpu.memory_space<vmem>>, %arg10: memref<16x128xbf16, #tpu.memory_space<vmem>>) attributes {dimension_semantics = [#tpu.dimension_semantics<parallel>], iteration_bounds = array<i64: 1>, scalar_prefetch = 0 : i64, scratch_operands = 0 : i64, tpu.core_type = #tpu.core_type<tc>, window_params = [{transform_indices = @transform_0, window_bounds = array<i64: 16, 784>}, {pipeline_mode = #tpu.pipeline_mode<synchronous>, transform_indices = @transform_1, window_bounds = array<i64: 784, 128>}, {pipeline_mode = #tpu.pipeline_mode<synchronous>, transform_indices = @transform_2, window_bounds = array<i64: 1, 128>}, {pipeline_mode = #tpu.pipeline_mode<synchronous>, transform_indices = @transform_3, window_bounds = array<i64: 128, 128>}, {pipeline_mode = #tpu.pipeline_mode<synchronous>, transform_indices = @transform_4, window_bounds = array<i64: 1, 128>}, {pipeline_mode = #tpu.pipeline_mode<synchronous>, transform_indices = @transform_5, window_bounds = array<i64: 128, 128>}, {pipeline_mode = #tpu.pipeline_mode<synchronous>, transform_indices = @transform_6, window_bounds = array<i64: 1, 128>}, {pipeline_mode = #tpu.pipeline_mode<synchronous>, transform_indices = @transform_7, window_bounds = array<i64: 128, 128>}, {pipeline_mode = #tpu.pipeline_mode<synchronous>, transform_indices = @transform_8, window_bounds = array<i64: 1, 128>}, {transform_indices = @transform_9, window_bounds = array<i64: 16, 128>}]} {
    %c0 = arith.constant 0 : index
    %c0_0 = arith.constant 0 : index
    %0 = vector.load %arg1[%c0, %c0_0] : memref<16x784xf32, #tpu.memory_space<vmem>>, vector<16x784xf32>
    %1 = arith.truncf %0 : vector<16x784xf32> to vector<16x784xbf16>
    %c0_1 = arith.constant 0 : index
    %c0_2 = arith.constant 0 : index
    %2 = vector.load %arg2[%c0_1, %c0_2] : memref<784x128xbf16, #tpu.memory_space<vmem>>, vector<784x128xbf16>
    %cst = arith.constant dense<0.000000e+00> : vector<16x128xf32>
    %3 = tpu.matmul %1, %2, %cst {dimension_numbers = #tpu.dot_dimension_numbers<[1], [0], [0], [1], [0, 0, 1, 1], [], []>} : vector<16x784xbf16>, vector<784x128xbf16>, vector<16x128xf32> -> vector<16x128xf32>
    %c0_3 = arith.constant 0 : index
    %c0_4 = arith.constant 0 : index
    %4 = vector.load %arg3[%c0_3, %c0_4] : memref<1x128xf32, #tpu.memory_space<vmem>>, vector<1x128xf32>
    %5 = vector.broadcast %4 : vector<1x128xf32> to vector<16x128xf32>
    %6 = arith.addf %3, %5 : vector<16x128xf32>
    %cst_5 = arith.constant 0.000000e+00 : f32
    %7 = vector.broadcast %cst_5 : f32 to vector<16x128xf32>
    %8 = arith.maximumf %6, %7 : vector<16x128xf32>
    %9 = arith.truncf %8 : vector<16x128xf32> to vector<16x128xbf16>
    %c0_6 = arith.constant 0 : index
    %c0_7 = arith.constant 0 : index
    %10 = vector.load %arg4[%c0_6, %c0_7] : memref<128x128xbf16, #tpu.memory_space<vmem>>, vector<128x128xbf16>
    %cst_8 = arith.constant dense<0.000000e+00> : vector<16x128xf32>
    %11 = tpu.matmul %9, %10, %cst_8 {dimension_numbers = #tpu.dot_dimension_numbers<[1], [0], [0], [1], [0, 0, 1, 1], [], []>} : vector<16x128xbf16>, vector<128x128xbf16>, vector<16x128xf32> -> vector<16x128xf32>
    %c0_9 = arith.constant 0 : index
    %c0_10 = arith.constant 0 : index
    %12 = vector.load %arg5[%c0_9, %c0_10] : memref<1x128xf32, #tpu.memory_space<vmem>>, vector<1x128xf32>
    %13 = vector.broadcast %12 : vector<1x128xf32> to vector<16x128xf32>
    %14 = arith.addf %11, %13 : vector<16x128xf32>
    %cst_11 = arith.constant 0.000000e+00 : f32
    %15 = vector.broadcast %cst_11 : f32 to vector<16x128xf32>
    %16 = arith.maximumf %14, %15 : vector<16x128xf32>
    %17 = arith.truncf %16 : vector<16x128xf32> to vector<16x128xbf16>
    %c0_12 = arith.constant 0 : index
    %c0_13 = arith.constant 0 : index
    %18 = vector.load %arg6[%c0_12, %c0_13] : memref<128x128xbf16, #tpu.memory_space<vmem>>, vector<128x128xbf16>
    %cst_14 = arith.constant dense<0.000000e+00> : vector<16x128xf32>
    %19 = tpu.matmul %17, %18, %cst_14 {dimension_numbers = #tpu.dot_dimension_numbers<[1], [0], [0], [1], [0, 0, 1, 1], [], []>} : vector<16x128xbf16>, vector<128x128xbf16>, vector<16x128xf32> -> vector<16x128xf32>
    %c0_15 = arith.constant 0 : index
    %c0_16 = arith.constant 0 : index
    %20 = vector.load %arg7[%c0_15, %c0_16] : memref<1x128xf32, #tpu.memory_space<vmem>>, vector<1x128xf32>
    %21 = vector.broadcast %20 : vector<1x128xf32> to vector<16x128xf32>
    %22 = arith.addf %19, %21 : vector<16x128xf32>
    %cst_17 = arith.constant 0.000000e+00 : f32
    %23 = vector.broadcast %cst_17 : f32 to vector<16x128xf32>
    %24 = arith.maximumf %22, %23 : vector<16x128xf32>
    %25 = arith.truncf %24 : vector<16x128xf32> to vector<16x128xbf16>
    %c0_18 = arith.constant 0 : index
    %c0_19 = arith.constant 0 : index
    %26 = vector.load %arg8[%c0_18, %c0_19] : memref<128x128xbf16, #tpu.memory_space<vmem>>, vector<128x128xbf16>
    %cst_20 = arith.constant dense<0.000000e+00> : vector<16x128xf32>
    %27 = tpu.matmul %25, %26, %cst_20 {dimension_numbers = #tpu.dot_dimension_numbers<[1], [0], [0], [1], [0, 0, 1, 1], [], []>} : vector<16x128xbf16>, vector<128x128xbf16>, vector<16x128xf32> -> vector<16x128xf32>
    %c0_21 = arith.constant 0 : index
    %c0_22 = arith.constant 0 : index
    %28 = vector.load %arg9[%c0_21, %c0_22] : memref<1x128xf32, #tpu.memory_space<vmem>>, vector<1x128xf32>
    %29 = vector.broadcast %28 : vector<1x128xf32> to vector<16x128xf32>
    %30 = arith.addf %27, %29 : vector<16x128xf32>
    %31 = tpu.iota {dimensions = array<i32: 1>} : vector<16x128xi32>
    %c10_i32 = arith.constant 10 : i32
    %32 = vector.broadcast %c10_i32 : i32 to vector<16x128xi32>
    %33 = arith.cmpi slt, %31, %32 : vector<16x128xi32>
    %cst_23 = arith.constant -1.000000e+30 : f32
    %34 = vector.broadcast %cst_23 : f32 to vector<16x128xf32>
    %35 = arith.select %33, %30, %34 : vector<16x128xi1>, vector<16x128xf32>
    %cst_24 = arith.constant dense<0xFF800000> : vector<16xf32>
    %36 = vector.multi_reduction <maximumf>, %35, %cst_24 [1] : vector<16x128xf32> to vector<16xf32>
    %37 = vector.shape_cast %36 : vector<16xf32> to vector<16x1xf32>
    %38 = vector.broadcast %37 : vector<16x1xf32> to vector<16x128xf32>
    %39 = arith.subf %35, %38 : vector<16x128xf32>
    %40 = math.exp %39 : vector<16x128xf32>
    %cst_25 = arith.constant dense<0.000000e+00> : vector<16xf32>
    %41 = vector.multi_reduction <add>, %40, %cst_25 [1] : vector<16x128xf32> to vector<16xf32>
    %42 = vector.shape_cast %41 : vector<16xf32> to vector<16x1xf32>
    %43 = math.log %42 : vector<16x1xf32>
    %44 = vector.broadcast %43 : vector<16x1xf32> to vector<16x128xf32>
    %45 = arith.subf %39, %44 : vector<16x128xf32>
    %46 = arith.truncf %45 : vector<16x128xf32> to vector<16x128xbf16>
    %c0_26 = arith.constant 0 : index
    %c0_27 = arith.constant 0 : index
    %47 = vector.load %arg10[%c0_26, %c0_27] : memref<16x128xbf16, #tpu.memory_space<vmem>>, vector<16x128xbf16>
    tpu.vector_store %arg10[%c0_26, %c0_27], %46 {strides = array<i32>} : memref<16x128xbf16, #tpu.memory_space<vmem>>, vector<16x128xbf16>,
    return
  }
  func.func @transform_0(%arg0: i32) -> (i32, i32) {
    %c0_i32 = arith.constant 0 : i32
    %c0_i32_0 = arith.constant 0 : i32
    return %arg0, %c0_i32 : i32, i32
  }
  func.func @transform_1(%arg0: i32) -> (i32, i32) {
    %c0_i32 = arith.constant 0 : i32
    %c0_i32_0 = arith.constant 0 : i32
    %c0_i32_1 = arith.constant 0 : i32
    return %c0_i32, %c0_i32_0 : i32, i32
  }
  func.func @transform_2(%arg0: i32) -> (i32, i32) {
    %c0_i32 = arith.constant 0 : i32
    %c0_i32_0 = arith.constant 0 : i32
    %c0_i32_1 = arith.constant 0 : i32
    return %c0_i32, %c0_i32_0 : i32, i32
  }
  func.func @transform_3(%arg0: i32) -> (i32, i32) {
    %c0_i32 = arith.constant 0 : i32
    %c0_i32_0 = arith.constant 0 : i32
    %c0_i32_1 = arith.constant 0 : i32
    return %c0_i32, %c0_i32_0 : i32, i32
  }
  func.func @transform_4(%arg0: i32) -> (i32, i32) {
    %c0_i32 = arith.constant 0 : i32
    %c0_i32_0 = arith.constant 0 : i32
    %c0_i32_1 = arith.constant 0 : i32
    return %c0_i32, %c0_i32_0 : i32, i32
  }
  func.func @transform_5(%arg0: i32) -> (i32, i32) {
    %c0_i32 = arith.constant 0 : i32
    %c0_i32_0 = arith.constant 0 : i32
    %c0_i32_1 = arith.constant 0 : i32
    return %c0_i32, %c0_i32_0 : i32, i32
  }
  func.func @transform_6(%arg0: i32) -> (i32, i32) {
    %c0_i32 = arith.constant 0 : i32
    %c0_i32_0 = arith.constant 0 : i32
    %c0_i32_1 = arith.constant 0 : i32
    return %c0_i32, %c0_i32_0 : i32, i32
  }
  func.func @transform_7(%arg0: i32) -> (i32, i32) {
    %c0_i32 = arith.constant 0 : i32
    %c0_i32_0 = arith.constant 0 : i32
    %c0_i32_1 = arith.constant 0 : i32
    return %c0_i32, %c0_i32_0 : i32, i32
  }
  func.func @transform_8(%arg0: i32) -> (i32, i32) {
    %c0_i32 = arith.constant 0 : i32
    %c0_i32_0 = arith.constant 0 : i32
    %c0_i32_1 = arith.constant 0 : i32
    return %c0_i32, %c0_i32_0 : i32, i32
  }
  func.func @transform_9(%arg0: i32) -> (i32, i32) {
    %c0_i32 = arith.constant 0 : i32
    %c0_i32_0 = arith.constant 0 : i32
    return %arg0, %c0_i32 : i32, i32
  }
}

</mosaic_0001>

<llo_original>
// kernel: tpu_custom_call.1
$region0: #{tpu_custom_call.1}
  #allocation0 [shape = 'u32[]', space=smem, size = 0x4, offset = 0x4, fixed_abs, tag = 'smem constant byte address 0x4 - core index']
  #allocation1 [shape = 'u32[144,128]{1,0:T(1,128)}', space=vmem, size = 0x12000, scoped, tag = 'internal scratch']
  %s0 = inlined_call_operand.hbm [shape: f32[8,784], index: 0, kind: input, shape index: {}]
  %s1 = inlined_call_operand.hbm [shape: bf16[784,128], index: 1, kind: input, shape index: {}]
  %s2 = inlined_call_operand.vmem [shape: f32[1,128], index: 2, kind: input, shape index: {}]
  %s3 = inlined_call_operand.hbm [shape: bf16[128,128], index: 3, kind: input, shape index: {}]
  %s4 = inlined_call_operand.vmem [shape: f32[1,128], index: 4, kind: input, shape index: {}]
  %s5 = inlined_call_operand.hbm [shape: bf16[128,128], index: 5, kind: input, shape index: {}]
  %s6 = inlined_call_operand.vmem [shape: f32[1,128], index: 6, kind: input, shape index: {}]
  %s7 = inlined_call_operand.hbm [shape: bf16[128,128], index: 7, kind: input, shape index: {}]
  %s8 = inlined_call_operand.vmem [shape: f32[1,128], index: 8, kind: input, shape index: {}]
  %s9 = inlined_call_operand.hbm [shape: bf16[8,128], index: 9, kind: output, shape index: {}]
  %s10 = sld [smem:[#allocation0]]
  $region66: #{tpu_custom_call.1} parent=0
    _
  %s12 = ssub.s32 1, %s10
  %s13 = scalar_select 0, %s12, %s10
  $region1: #{tpu_custom_call.1} parent=0
    #allocation2 [shape = 'u8[57344]{0}', space=vmem, size = 0xe000, scoped, tag = 'input window, operand 0, single buffered']
    #allocation3 [shape = 's32[1]{0}', space=sflag, size = 0x4, scoped, tag = 'scoped memory for tpu_custom_call.1']
    #allocation4 [shape = 's32[1]{0}', space=sflag, size = 0x4, scoped, tag = 'scoped memory for tpu_custom_call.1']
    #allocation5 [shape = 'u8[200704]{0}', space=vmem, size = 0x31000, scoped, tag = 'input window, operand 1, single buffered']
    #allocation6 [shape = 's32[1]{0}', space=sflag, size = 0x4, scoped, tag = 'scoped memory for tpu_custom_call.1']
    #allocation7 [shape = 'u8[32768]{0}', space=vmem, size = 0x8000, scoped, tag = 'input window, operand 3, single buffered']
    #allocation8 [shape = 'u8[32768]{0}', space=vmem, size = 0x8000, scoped, tag = 'input window, operand 5, single buffered']
    #allocation9 [shape = 's32[1]{0}', space=sflag, size = 0x4, scoped, tag = 'scoped memory for tpu_custom_call.1']
    #allocation10 [shape = 'u8[32768]{0}', space=vmem, size = 0x8000, scoped, tag = 'input window, operand 7, single buffered']
    #allocation11 [shape = 'u8[4096]{0}', space=vmem, size = 0x1000, scoped, tag = 'output window, operand 0, single buffered']
    %14 = vsyncpa [#allocation3], 0
    %15 = vsyncpa [#allocation6], 0
    %16 = vsyncpa [#allocation9], 0
    %17 = vsyncpa [#allocation4], 0
    // Predicated region
    $region2: #{tpu_custom_call.1} parent=1 // pred_check
      _
    $region3: #{tpu_custom_call.1} parent=1 // pred_check_branch
      %19 = sbr.rel (0) target = $region5
    $region4: #{tpu_custom_call.1} parent=1 // pred_region
      %s21 = ssub.s32 1792, 896
      %22 = vsyncadd [#allocation3], %s21
      %s23 = sshll.u32 [#allocation2], 4
      %s24 = int_to_ptr.vmem [resolvable:$true] %s23
      %29 = dma.hbm_to_vmem [thread:$0]  %s0, 896, %s24, [#allocation3], 896, 896, 56
    $region5: #{tpu_custom_call.1} parent=1 // pred_fallthru
      _
    // Predicated region
    $region6: #{tpu_custom_call.1} parent=1 // pred_check
      _
    $region7: #{tpu_custom_call.1} parent=1 // pred_check_branch
      %31 = sbr.rel (0) target = $region9
    $region8: #{tpu_custom_call.1} parent=1 // pred_region
      %s33 = ssub.s32 6272, 6272
      %34 = vsyncadd [#allocation6], %s33
      %s35 = sshll.u32 [#allocation5], 4
      %s36 = int_to_ptr.vmem [resolvable:$true] %s35
      %41 = dma.hbm_to_vmem [thread:$0]  %s1, 6272, %s36, [#allocation6], 64, 64, 4
    $region9: #{tpu_custom_call.1} parent=1 // pred_fallthru
      _
    // Predicated region
    $region10: #{tpu_custom_call.1} parent=1 // pred_check
      _
    $region11: #{tpu_custom_call.1} parent=1 // pred_check_branch
      %43 = sbr.rel (0) target = $region13
    $region12: #{tpu_custom_call.1} parent=1 // pred_region
      _
    $region13: #{tpu_custom_call.1} parent=1 // pred_fallthru
      _
    // Predicated region
    $region14: #{tpu_custom_call.1} parent=1 // pred_check
      _
    $region15: #{tpu_custom_call.1} parent=1 // pred_check_branch
      %45 = sbr.rel (0) target = $region17
    $region16: #{tpu_custom_call.1} parent=1 // pred_region
      %s47 = ssub.s32 1024, 1024
      %48 = vsyncadd [#allocation6], %s47
      %s49 = sshll.u32 [#allocation7], 4
      %s50 = int_to_ptr.vmem [resolvable:$true] %s49
      %55 = dma.hbm_to_vmem [thread:$0]  %s3, 1024, %s50, [#allocation6], 64, 64, 4
    $region17: #{tpu_custom_call.1} parent=1 // pred_fallthru
      _
    // Predicated region
    $region18: #{tpu_custom_call.1} parent=1 // pred_check
      _
    $region19: #{tpu_custom_call.1} parent=1 // pred_check_branch
      %57 = sbr.rel (0) target = $region21
    $region20: #{tpu_custom_call.1} parent=1 // pred_region
      _
    $region21: #{tpu_custom_call.1} parent=1 // pred_fallthru
      _
    // Predicated region
    $region22: #{tpu_custom_call.1} parent=1 // pred_check
      _
    $region23: #{tpu_custom_call.1} parent=1 // pred_check_branch
      %59 = sbr.rel (0) target = $region25
    $region24: #{tpu_custom_call.1} parent=1 // pred_region
      %s61 = ssub.s32 1024, 1024
      %62 = vsyncadd [#allocation9], %s61
      %s63 = sshll.u32 [#allocation8], 4
      %s64 = int_to_ptr.vmem [resolvable:$true] %s63
      %69 = dma.hbm_to_vmem [thread:$0]  %s5, 1024, %s64, [#allocation9], 64, 64, 4
    $region25: #{tpu_custom_call.1} parent=1 // pred_fallthru
      _
    // Predicated region
    $region26: #{tpu_custom_call.1} parent=1 // pred_check
      _
    $region27: #{tpu_custom_call.1} parent=1 // pred_check_branch
      %71 = sbr.rel (0) target = $region29
    $region28: #{tpu_custom_call.1} parent=1 // pred_region
      _
    $region29: #{tpu_custom_call.1} parent=1 // pred_fallthru
      _
    // Predicated region
    $region30: #{tpu_custom_call.1} parent=1 // pred_check
      _
    $region31: #{tpu_custom_call.1} parent=1 // pred_check_branch
      %73 = sbr.rel (0) target = $region33
    $region32: #{tpu_custom_call.1} parent=1 // pred_region
      %s75 = ssub.s32 1024, 1024
      %76 = vsyncadd [#allocation9], %s75
      %s77 = sshll.u32 [#allocation10], 4
      %s78 = int_to_ptr.vmem [resolvable:$true] %s77
      %83 = dma.hbm_to_vmem [thread:$0]  %s7, 1024, %s78, [#allocation9], 64, 64, 4
    $region33: #{tpu_custom_call.1} parent=1 // pred_fallthru
      _
    // Predicated region
    $region34: #{tpu_custom_call.1} parent=1 // pred_check
      _
    $region35: #{tpu_custom_call.1} parent=1 // pred_check_branch
      %85 = sbr.rel (0) target = $region37
    $region36: #{tpu_custom_call.1} parent=1 // pred_region
      _
    $region37: #{tpu_custom_call.1} parent=1 // pred_fallthru
      _
    // Predicated region
    $region38: #{tpu_custom_call.1} parent=1 // pred_check
      _
    $region39: #{tpu_custom_call.1} parent=1 // pred_check_branch
      %87 = sbr.rel (0) target = $region41
    $region40: #{tpu_custom_call.1} parent=1 // pred_region
      %88 = dma.done [#allocation3], 1792
    $region41: #{tpu_custom_call.1} parent=1 // pred_fallthru
      _
    // Predicated region
    $region42: #{tpu_custom_call.1} parent=1 // pred_check
      _
    $region43: #{tpu_custom_call.1} parent=1 // pred_check_branch
      %90 = sbr.rel (0) target = $region45
    $region44: #{tpu_custom_call.1} parent=1 // pred_region
      %91 = dma.done [#allocation6], 6272
    $region45: #{tpu_custom_call.1} parent=1 // pred_fallthru
      _
    // Predicated region
    $region46: #{tpu_custom_call.1} parent=1 // pred_check
      _
    $region47: #{tpu_custom_call.1} parent=1 // pred_check_branch
      %93 = sbr.rel (0) target = $region49
    $region48: #{tpu_custom_call.1} parent=1 // pred_region
      %94 = dma.done [#allocation6], 1024
    $region49: #{tpu_custom_call.1} parent=1 // pred_fallthru
      _
    // Predicated region
    $region50: #{tpu_custom_call.1} parent=1 // pred_check
      _
    $region51: #{tpu_custom_call.1} parent=1 // pred_check_branch
      %96 = sbr.rel (0) target = $region53
    $region52: #{tpu_custom_call.1} parent=1 // pred_region
      %97 = dma.done [#allocation9], 1024
    $region53: #{tpu_custom_call.1} parent=1 // pred_fallthru
      _
    // Predicated region
    $region54: #{tpu_custom_call.1} parent=1 // pred_check
      _
    $region55: #{tpu_custom_call.1} parent=1 // pred_check_branch
      %99 = sbr.rel (0) target = $region57
    $region56: #{tpu_custom_call.1} parent=1 // pred_region
      %100 = dma.done [#allocation9], 1024
    $region57: #{tpu_custom_call.1} parent=1 // pred_fallthru
      _
    %v102 = vld [vmem:[#allocation2] sm:$0xff]
    %v103 = vld [vmem:[#allocation2 + $0x8] sm:$0xff]
    %v104 = vld [vmem:[#allocation2 + $0x10] sm:$0xff]
    %v105 = vld [vmem:[#allocation2 + $0x18] sm:$0xff]
    %v106 = vld [vmem:[#allocation2 + $0x20] sm:$0xff]
    %v107 = vld [vmem:[#allocation2 + $0x28] sm:$0xff]
    %v108 = vld [vmem:[#allocation2 + $0x30] sm:$0xff]
    %v109 = vld [vmem:[#allocation2 + $0x38] sm:$0xff]
    %v110 = vld [vmem:[#allocation2 + $0x40] sm:$0xff]
    %v111 = vld [vmem:[#allocation2 + $0x48] sm:$0xff]
    %v112 = vld [vmem:[#allocation2 + $0x50] sm:$0xff]
    %v113 = vld [vmem:[#allocation2 + $0x58] sm:$0xff]
    %v114 = vld [vmem:[#allocation2 + $0x60] sm:$0xff]
    %v115 = vld [vmem:[#allocation2 + $0x68] sm:$0xff]
    %v116 = vpack.c.bf16 %v109, %v102
    %v117 = vpack.c.bf16 %v110, %v103
    %v118 = vpack.c.bf16 %v111, %v104
    %v119 = vpack.c.bf16 %v112, %v105
    %v120 = vpack.c.bf16 %v113, %v106
    %v121 = vpack.c.bf16 %v114, %v107
    %v122 = vpack.c.bf16 %v115, %v108
    %v123 = vld [vmem:[#allocation5] sm:$0xf]
    %v124 = vld [vmem:[#allocation5 + $0x4] sm:$0xf]
    %v125 = vld [vmem:[#allocation5 + $0x8] sm:$0xf]
    %v126 = vld [vmem:[#allocation5 + $0xc] sm:$0xf]
    %v127 = vld [vmem:[#allocation5 + $0x10] sm:$0xf]
    %v128 = vld [vmem:[#allocation5 + $0x14] sm:$0xf]
    %v129 = vld [vmem:[#allocation5 + $0x18] sm:$0xf]
    %v130 = vld [vmem:[#allocation5 + $0x1c] sm:$0xf]
    %v131 = vld [vmem:[#allocation5 + $0x20] sm:$0xf]
    %v132 = vld [vmem:[#allocation5 + $0x24] sm:$0xf]
    %v133 = vld [vmem:[#allocation5 + $0x28] sm:$0xf]
    %v134 = vld [vmem:[#allocation5 + $0x2c] sm:$0xf]
    %v135 = vld [vmem:[#allocation5 + $0x30] sm:$0xf]
    %v136 = vld [vmem:[#allocation5 + $0x34] sm:$0xf]
    %v137 = vld [vmem:[#allocation5 + $0x38] sm:$0xf]
    %v138 = vld [vmem:[#allocation5 + $0x3c] sm:$0xf]
    %v139 = vld [vmem:[#allocation5 + $0x40] sm:$0xf]
    %v140 = vld [vmem:[#allocation5 + $0x44] sm:$0xf]
    %v141 = vld [vmem:[#allocation5 + $0x48] sm:$0xf]
    %v142 = vld [vmem:[#allocation5 + $0x4c] sm:$0xf]
    %v143 = vld [vmem:[#allocation5 + $0x50] sm:$0xf]
    %v144 = vld [vmem:[#allocation5 + $0x54] sm:$0xf]
    %v145 = vld [vmem:[#allocation5 + $0x58] sm:$0xf]
    %v146 = vld [vmem:[#allocation5 + $0x5c] sm:$0xf]
    %v147 = vld [vmem:[#allocation5 + $0x60] sm:$0xf]
    %v148 = vld [vmem:[#allocation5 + $0x64] sm:$0xf]
    %v149 = vld [vmem:[#allocation5 + $0x68] sm:$0xf]
    %v150 = vld [vmem:[#allocation5 + $0x6c] sm:$0xf]
    %v151 = vld [vmem:[#allocation5 + $0x70] sm:$0xf]
    %v152 = vld [vmem:[#allocation5 + $0x74] sm:$0xf]
    %v153 = vld [vmem:[#allocation5 + $0x78] sm:$0xf]
    %v154 = vld [vmem:[#allocation5 + $0x7c] sm:$0xf]
    %v155 = vld [vmem:[#allocation5 + $0x80] sm:$0xf]
    %v156 = vld [vmem:[#allocation5 + $0x84] sm:$0xf]
    %v157 = vld [vmem:[#allocation5 + $0x88] sm:$0xf]
    %v158 = vld [vmem:[#allocation5 + $0x8c] sm:$0xf]
    %v159 = vld [vmem:[#allocation5 + $0x90] sm:$0xf]
    %v160 = vld [vmem:[#allocation5 + $0x94] sm:$0xf]
    %v161 = vld [vmem:[#allocation5 + $0x98] sm:$0xf]
    %v162 = vld [vmem:[#allocation5 + $0x9c] sm:$0xf]
    %v163 = vld [vmem:[#allocation5 + $0xa0] sm:$0xf]
    %v164 = vld [vmem:[#allocation5 + $0xa4] sm:$0xf]
    %v165 = vld [vmem:[#allocation5 + $0xa8] sm:$0xf]
    %v166 = vld [vmem:[#allocation5 + $0xac] sm:$0xf]
    %v167 = vld [vmem:[#allocation5 + $0xb0] sm:$0xf]
    %v168 = vld [vmem:[#allocation5 + $0xb4] sm:$0xf]
    %v169 = vld [vmem:[#allocation5 + $0xb8] sm:$0xf]
    %v170 = vld [vmem:[#allocation5 + $0xbc] sm:$0xf]
    %v171 = vld [vmem:[#allocation5 + $0xc0] sm:$0xf]
    %v172 = vld [vmem:[#allocation5 + $0xc4] sm:$0xf]
    %v173 = vld [vmem:[#allocation5 + $0xc8] sm:$0xf]
    %v174 = vld [vmem:[#allocation5 + $0xcc] sm:$0xf]
    %v175 = vld [vmem:[#allocation5 + $0xd0] sm:$0xf]
    %v176 = vld [vmem:[#allocation5 + $0xd4] sm:$0xf]
    %v177 = vld [vmem:[#allocation5 + $0xd8] sm:$0xf]
    %v178 = vld [vmem:[#allocation5 + $0xdc] sm:$0xf]
    %v179 = vld [vmem:[#allocation5 + $0xe0] sm:$0xf]
    %v180 = vld [vmem:[#allocation5 + $0xe4] sm:$0xf]
    %v181 = vld [vmem:[#allocation5 + $0xe8] sm:$0xf]
    %v182 = vld [vmem:[#allocation5 + $0xec] sm:$0xf]
    %v183 = vld [vmem:[#allocation5 + $0xf0] sm:$0xf]
    %v184 = vld [vmem:[#allocation5 + $0xf4] sm:$0xf]
    %v185 = vld [vmem:[#allocation5 + $0xf8] sm:$0xf]
    %v186 = vld [vmem:[#allocation5 + $0xfc] sm:$0xf]
    %v187 = vld [vmem:[#allocation5 + $0x100] sm:$0xf]
    %v188 = vld [vmem:[#allocation5 + $0x104] sm:$0xf]
    %v189 = vld [vmem:[#allocation5 + $0x108] sm:$0xf]
    %v190 = vld [vmem:[#allocation5 + $0x10c] sm:$0xf]
    %v191 = vld [vmem:[#allocation5 + $0x110] sm:$0xf]
    %v192 = vld [vmem:[#allocation5 + $0x114] sm:$0xf]
    %v193 = vld [vmem:[#allocation5 + $0x118] sm:$0xf]
    %v194 = vld [vmem:[#allocation5 + $0x11c] sm:$0xf]
    %v195 = vld [vmem:[#allocation5 + $0x120] sm:$0xf]
    %v196 = vld [vmem:[#allocation5 + $0x124] sm:$0xf]
    %v197 = vld [vmem:[#allocation5 + $0x128] sm:$0xf]
    %v198 = vld [vmem:[#allocation5 + $0x12c] sm:$0xf]
    %v199 = vld [vmem:[#allocation5 + $0x130] sm:$0xf]
    %v200 = vld [vmem:[#allocation5 + $0x134] sm:$0xf]
    %v201 = vld [vmem:[#allocation5 + $0x138] sm:$0xf]
    %v202 = vld [vmem:[#allocation5 + $0x13c] sm:$0xf]
    %v203 = vld [vmem:[#allocation5 + $0x140] sm:$0xf]
    %v204 = vld [vmem:[#allocation5 + $0x144] sm:$0xf]
    %v205 = vld [vmem:[#allocation5 + $0x148] sm:$0xf]
    %v206 = vld [vmem:[#allocation5 + $0x14c] sm:$0xf]
    %v207 = vld [vmem:[#allocation5 + $0x150] sm:$0xf]
    %v208 = vld [vmem:[#allocation5 + $0x154] sm:$0xf]
    %v209 = vld [vmem:[#allocation5 + $0x158] sm:$0xf]
    %v210 = vld [vmem:[#allocation5 + $0x15c] sm:$0xf]
    %v211 = vld [vmem:[#allocation5 + $0x160] sm:$0xf]
    %v212 = vld [vmem:[#allocation5 + $0x164] sm:$0xf]
    %v213 = vld [vmem:[#allocation5 + $0x168] sm:$0xf]
    %v214 = vld [vmem:[#allocation5 + $0x16c] sm:$0xf]
    %v215 = vld [vmem:[#allocation5 + $0x170] sm:$0xf]
    %v216 = vld [vmem:[#allocation5 + $0x174] sm:$0xf]
    %v217 = vld [vmem:[#allocation5 + $0x178] sm:$0xf]
    %v218 = vld [vmem:[#allocation5 + $0x17c] sm:$0xf]
    %v219 = vld [vmem:[#allocation5 + $0x180] sm:$0xf]
    %v220 = vld [vmem:[#allocation5 + $0x184] sm:$0xf]
    %v221 = vld [vmem:[%s2] sm:$0x1]
    %v223 = vlaneseq
    %v224 = vshrl.u32 %v223, 7
    %v225 = vsub.s32 0, %v224
    %v226 = vrot.slane %v221, %v225
    %v326 = vunpack.c.l.b16 %v123
    %v327 = vunpack.c.l.b16 %v124
    %v328 = vunpack.c.l.b16 %v125
    %v329 = vunpack.c.l.b16 %v126
    %v330 = vunpack.c.l.b16 %v127
    %v331 = vunpack.c.l.b16 %v128
    %v332 = vunpack.c.l.b16 %v129
    %v333 = vunpack.c.l.b16 %v130
    %v334 = vunpack.c.l.b16 %v131
    %v335 = vunpack.c.l.b16 %v132
    %v336 = vunpack.c.l.b16 %v133
    %v337 = vunpack.c.l.b16 %v134
    %v338 = vunpack.c.l.b16 %v135
    %v339 = vunpack.c.l.b16 %v136
    %v340 = vunpack.c.l.b16 %v137
    %v341 = vunpack.c.l.b16 %v138
    %v342 = vunpack.c.l.b16 %v139
    %v343 = vunpack.c.l.b16 %v140
    %v344 = vunpack.c.l.b16 %v141
    %v345 = vunpack.c.l.b16 %v142
    %v346 = vunpack.c.l.b16 %v143
    %v347 = vunpack.c.l.b16 %v144
    %v348 = vunpack.c.l.b16 %v145
    %v349 = vunpack.c.l.b16 %v146
    %v350 = vunpack.c.l.b16 %v147
    %v351 = vunpack.c.l.b16 %v148
    %v352 = vunpack.c.l.b16 %v149
    %v353 = vunpack.c.l.b16 %v150
    %v354 = vunpack.c.l.b16 %v151
    %v355 = vunpack.c.l.b16 %v152
    %v356 = vunpack.c.l.b16 %v153
    %v357 = vunpack.c.l.b16 %v154
    %v358 = vunpack.c.l.b16 %v155
    %v359 = vunpack.c.l.b16 %v156
    %v360 = vunpack.c.l.b16 %v157
    %v361 = vunpack.c.l.b16 %v158
    %v362 = vunpack.c.l.b16 %v159
    %v363 = vunpack.c.l.b16 %v160
    %v364 = vunpack.c.l.b16 %v161
    %v365 = vunpack.c.l.b16 %v162
    %v366 = vunpack.c.l.b16 %v163
    %v367 = vunpack.c.l.b16 %v164
    %v368 = vunpack.c.l.b16 %v165
    %v369 = vunpack.c.l.b16 %v166
    %v370 = vunpack.c.l.b16 %v167
    %v371 = vunpack.c.l.b16 %v168
    %v372 = vunpack.c.l.b16 %v169
    %v373 = vunpack.c.l.b16 %v170
    %v374 = vunpack.c.l.b16 %v171
    %v375 = vunpack.c.l.b16 %v172
    %v376 = vunpack.c.l.b16 %v173
    %v377 = vunpack.c.l.b16 %v174
    %v378 = vunpack.c.l.b16 %v175
    %v379 = vunpack.c.l.b16 %v176
    %v380 = vunpack.c.l.b16 %v177
    %v381 = vunpack.c.l.b16 %v178
    %v382 = vunpack.c.l.b16 %v179
    %v383 = vunpack.c.l.b16 %v180
    %v384 = vunpack.c.l.b16 %v181
    %v385 = vunpack.c.l.b16 %v182
    %v386 = vunpack.c.l.b16 %v183
    %v387 = vunpack.c.l.b16 %v184
    %v388 = vunpack.c.l.b16 %v185
    %v389 = vunpack.c.l.b16 %v186
    %v390 = vunpack.c.l.b16 %v187
    %v391 = vunpack.c.l.b16 %v188
    %v392 = vunpack.c.l.b16 %v189
    %v393 = vunpack.c.l.b16 %v190
    %v394 = vunpack.c.l.b16 %v191
    %v395 = vunpack.c.l.b16 %v192
    %v396 = vunpack.c.l.b16 %v193
    %v397 = vunpack.c.l.b16 %v194
    %v398 = vunpack.c.l.b16 %v195
    %v399 = vunpack.c.l.b16 %v196
    %v400 = vunpack.c.l.b16 %v197
    %v401 = vunpack.c.l.b16 %v198
    %v402 = vunpack.c.l.b16 %v199
    %v403 = vunpack.c.l.b16 %v200
    %v404 = vunpack.c.l.b16 %v201
    %v405 = vunpack.c.l.b16 %v202
    %v406 = vunpack.c.l.b16 %v203
    %v407 = vunpack.c.l.b16 %v204
    %v408 = vunpack.c.l.b16 %v205
    %v409 = vunpack.c.l.b16 %v206
    %v410 = vunpack.c.l.b16 %v207
    %v411 = vunpack.c.l.b16 %v208
    %v412 = vunpack.c.l.b16 %v209
    %v413 = vunpack.c.l.b16 %v210
    %v414 = vunpack.c.l.b16 %v211
    %v415 = vunpack.c.l.b16 %v212
    %v416 = vunpack.c.l.b16 %v213
    %v417 = vunpack.c.l.b16 %v214
    %v418 = vunpack.c.l.b16 %v215
    %v419 = vunpack.c.l.b16 %v216
    %v420 = vunpack.c.l.b16 %v217
    %v421 = vunpack.c.l.b16 %v218
    %v422 = vunpack.c.l.b16 %v219
    %v423 = vunpack.c.l.b16 %v220
    %v424 = vpack.c.b16 %v327, %v326
    %v425 = vpack.c.b16 %v329, %v328
    %v426 = vpack.c.b16 %v331, %v330
    %v427 = vpack.c.b16 %v333, %v332
    %v428 = vpack.c.b16 %v335, %v334
    %v429 = vpack.c.b16 %v337, %v336
    %v430 = vpack.c.b16 %v339, %v338
    %v431 = vpack.c.b16 %v341, %v340
    %v432 = vpack.c.b16 %v343, %v342
    %v433 = vpack.c.b16 %v345, %v344
    %v434 = vpack.c.b16 %v347, %v346
    %v435 = vpack.c.b16 %v349, %v348
    %v436 = vpack.c.b16 %v351, %v350
    %v437 = vpack.c.b16 %v353, %v352
    %v438 = vpack.c.b16 %v355, %v354
    %v439 = vpack.c.b16 %v357, %v356
    %v440 = vpack.c.b16 %v359, %v358
    %v441 = vpack.c.b16 %v361, %v360
    %v442 = vpack.c.b16 %v363, %v362
    %v443 = vpack.c.b16 %v365, %v364
    %v444 = vpack.c.b16 %v367, %v366
    %v445 = vpack.c.b16 %v369, %v368
    %v446 = vpack.c.b16 %v371, %v370
    %v447 = vpack.c.b16 %v373, %v372
    %v448 = vpack.c.b16 %v375, %v374
    %v449 = vpack.c.b16 %v377, %v376
    %v450 = vpack.c.b16 %v379, %v378
    %v451 = vpack.c.b16 %v381, %v380
    %v452 = vpack.c.b16 %v383, %v382
    %v453 = vpack.c.b16 %v385, %v384
    %v454 = vpack.c.b16 %v387, %v386
    %v455 = vpack.c.b16 %v389, %v388
    %v456 = vpack.c.b16 %v391, %v390
    %v457 = vpack.c.b16 %v393, %v392
    %v458 = vpack.c.b16 %v395, %v394
    %v459 = vpack.c.b16 %v397, %v396
    %v460 = vpack.c.b16 %v399, %v398
    %v461 = vpack.c.b16 %v401, %v400
    %v462 = vpack.c.b16 %v403, %v402
    %v463 = vpack.c.b16 %v405, %v404
    %v464 = vpack.c.b16 %v407, %v406
    %v465 = vpack.c.b16 %v409, %v408
    %v466 = vpack.c.b16 %v411, %v410
    %v467 = vpack.c.b16 %v413, %v412
    %v468 = vpack.c.b16 %v415, %v414
    %v469 = vpack.c.b16 %v417, %v416
    %v470 = vpack.c.b16 %v419, %v418
    %v471 = vpack.c.b16 %v421, %v420
    %v472 = vpack.c.b16 %v423, %v422
    %vm522 = vcmask 130048
    %v524 = vsel %vm522, %v122, 0
    %526 = vmatprep.subr.bf16.mxu0 0
    %527 = vmatpush1.bf16.msra.mxu0 %v424
    %528 = vmatprep.subr.bf16.mxu0 0
    %529 = vmatpush1.bf16.msra.mxu0 %v425
    %530 = vmatprep.subr.bf16.mxu0 0
    %531 = vmatpush1.bf16.msra.mxu0 %v426
    %532 = vmatprep.subr.bf16.mxu0 0
    %533 = vmatpush1.bf16.msra.mxu0 %v427
    %534 = vmatprep.subr.bf16.mxu0 0
    %535 = vmatpush1.bf16.msra.mxu0 %v428
    %536 = vmatprep.subr.bf16.mxu0 0
    %537 = vmatpush1.bf16.msra.mxu0 %v429
    %538 = vmatprep.subr.bf16.mxu0 0
    %539 = vmatpush1.bf16.msra.mxu0 %v430
    %540 = vmatprep.subr.bf16.mxu0 0
    %541 = vmatpush1.bf16.msra.mxu0 %v431
    %542 = vmatprep.subr.bf16.mxu0 0
    %543 = vmatpush1.bf16.msra.mxu0 %v432
    %544 = vmatprep.subr.bf16.mxu0 0
    %545 = vmatpush1.bf16.msra.mxu0 %v433
    %546 = vmatprep.subr.bf16.mxu0 0
    %547 = vmatpush1.bf16.msra.mxu0 %v434
    %548 = vmatprep.subr.bf16.mxu0 0
    %549 = vmatpush1.bf16.msra.mxu0 %v435
    %550 = vmatprep.subr.bf16.mxu0 0
    %551 = vmatpush1.bf16.msra.mxu0 %v436
    %552 = vmatprep.subr.bf16.mxu0 0
    %553 = vmatpush1.bf16.msra.mxu0 %v437
    %554 = vmatprep.subr.bf16.mxu0 0
    %555 = vmatpush1.bf16.msra.mxu0 %v438
    %556 = vmatprep.subr.bf16.mxu0 0
    %557 = vmatpush1.bf16.msra.mxu0 %v439
    %558 = vmatprep.mubr.bf16.mxu0 %v117
    %559 = vmatmul.mubr.bf16.gmra.mrb[0].mxu0 %v116
    %v560 = vpop.f32.mrb[0].mxu0
    %v561 = vadd.f32 %v226, %v560
    %v562 = vpop.f32.mrb[0].mxu0
    %v563 = vpop.f32.mrb[0].mxu0
    %v564 = vadd.f32 %v226, %v563
    %v565 = vpop.f32.mrb[0].mxu0
    %566 = vdwg.mxu0
    %567 = vmatprep.subr.bf16.mxu0 0
    %568 = vmatpush1.bf16.msra.mxu0 %v440
    %569 = vmatprep.subr.bf16.mxu0 0
    %570 = vmatpush1.bf16.msra.mxu0 %v441
    %571 = vmatprep.subr.bf16.mxu0 0
    %572 = vmatpush1.bf16.msra.mxu0 %v442
    %573 = vmatprep.subr.bf16.mxu0 0
    %574 = vmatpush1.bf16.msra.mxu0 %v443
    %575 = vmatprep.subr.bf16.mxu0 0
    %576 = vmatpush1.bf16.msra.mxu0 %v444
    %577 = vmatprep.subr.bf16.mxu0 0
    %578 = vmatpush1.bf16.msra.mxu0 %v445
    %579 = vmatprep.subr.bf16.mxu0 0
    %580 = vmatpush1.bf16.msra.mxu0 %v446
    %581 = vmatprep.subr.bf16.mxu0 0
    %582 = vmatpush1.bf16.msra.mxu0 %v447
    %583 = vmatprep.subr.bf16.mxu0 0
    %584 = vmatpush1.bf16.msra.mxu0 %v448
    %585 = vmatprep.subr.bf16.mxu0 0
    %586 = vmatpush1.bf16.msra.mxu0 %v449
    %587 = vmatprep.subr.bf16.mxu0 0
    %588 = vmatpush1.bf16.msra.mxu0 %v450
    %589 = vmatprep.subr.bf16.mxu0 0
    %590 = vmatpush1.bf16.msra.mxu0 %v451
    %591 = vmatprep.subr.bf16.mxu0 0
    %592 = vmatpush1.bf16.msra.mxu0 %v452
    %593 = vmatprep.subr.bf16.mxu0 0
    %594 = vmatpush1.bf16.msra.mxu0 %v453
    %595 = vmatprep.subr.bf16.mxu0 0
    %596 = vmatpush1.bf16.msra.mxu0 %v454
    %597 = vmatprep.subr.bf16.mxu0 0
    %598 = vmatpush1.bf16.msra.mxu0 %v455
    %599 = vmatprep.mubr.bf16.mxu0 %v119
    %600 = vmatmul.mubr.bf16.gmra.mrb[0].mxu0 %v118
    %v601 = vpop.f32.mrb[0].mxu0
    %v602 = vadd.f32 %v561, %v601
    %v603 = vpop.f32.mrb[0].mxu0
    %v604 = vpop.f32.mrb[0].mxu0
    %v605 = vadd.f32 %v564, %v604
    %v606 = vpop.f32.mrb[0].mxu0
    %607 = vdwg.mxu0
    %608 = vmatprep.subr.bf16.mxu0 0
    %609 = vmatpush1.bf16.msra.mxu0 %v456
    %610 = vmatprep.subr.bf16.mxu0 0
    %611 = vmatpush1.bf16.msra.mxu0 %v457
    %612 = vmatprep.subr.bf16.mxu0 0
    %613 = vmatpush1.bf16.msra.mxu0 %v458
    %614 = vmatprep.subr.bf16.mxu0 0
    %615 = vmatpush1.bf16.msra.mxu0 %v459
    %616 = vmatprep.subr.bf16.mxu0 0
    %617 = vmatpush1.bf16.msra.mxu0 %v460
    %618 = vmatprep.subr.bf16.mxu0 0
    %619 = vmatpush1.bf16.msra.mxu0 %v461
    %620 = vmatprep.subr.bf16.mxu0 0
    %621 = vmatpush1.bf16.msra.mxu0 %v462
    %622 = vmatprep.subr.bf16.mxu0 0
    %623 = vmatpush1.bf16.msra.mxu0 %v463
    %624 = vmatprep.subr.bf16.mxu0 0
    %625 = vmatpush1.bf16.msra.mxu0 %v464
    %626 = vmatprep.subr.bf16.mxu0 0
    %627 = vmatpush1.bf16.msra.mxu0 %v465
    %628 = vmatprep.subr.bf16.mxu0 0
    %629 = vmatpush1.bf16.msra.mxu0 %v466
    %630 = vmatprep.subr.bf16.mxu0 0
    %631 = vmatpush1.bf16.msra.mxu0 %v467
    %632 = vmatprep.subr.bf16.mxu0 0
    %633 = vmatpush1.bf16.msra.mxu0 %v468
    %634 = vmatprep.subr.bf16.mxu0 0
    %635 = vmatpush1.bf16.msra.mxu0 %v469
    %636 = vmatprep.subr.bf16.mxu0 0
    %637 = vmatpush1.bf16.msra.mxu0 %v470
    %638 = vmatprep.subr.bf16.mxu0 0
    %639 = vmatpush1.bf16.msra.mxu0 %v471
    %640 = vmatprep.mubr.bf16.mxu0 %v121
    %641 = vmatmul.mubr.bf16.gmra.mrb[0].mxu0 %v120
    %v642 = vpop.f32.mrb[0].mxu0
    %v643 = vadd.f32 %v602, %v642
    %v644 = vpop.f32.mrb[0].mxu0
    %v645 = vpop.f32.mrb[0].mxu0
    %v646 = vadd.f32 %v605, %v645
    %v647 = vpop.f32.mrb[0].mxu0
    %648 = vdwg.mxu0
    %649 = vmatprep.subr.bf16.mxu0 0
    %650 = vmatpush1.bf16.msra.mxu0 %v472
    %651 = vmatprep.subr.bf16.mxu0 0
    %652 = vmatpush1.bf16.msra.mxu0 0
    %653 = vmatprep.subr.bf16.mxu0 0
    %654 = vmatpush1.bf16.msra.mxu0 0
    %655 = vmatprep.subr.bf16.mxu0 0
    %656 = vmatpush1.bf16.msra.mxu0 0
    %657 = vmatprep.subr.bf16.mxu0 0
    %658 = vmatpush1.bf16.msra.mxu0 0
    %659 = vmatprep.subr.bf16.mxu0 0
    %660 = vmatpush1.bf16.msra.mxu0 0
    %661 = vmatprep.subr.bf16.mxu0 0
    %662 = vmatpush1.bf16.msra.mxu0 0
    %663 = vmatprep.subr.bf16.mxu0 0
    %664 = vmatpush1.bf16.msra.mxu0 0
    %665 = vmatprep.subr.bf16.mxu0 0
    %666 = vmatpush1.bf16.msra.mxu0 0
    %667 = vmatprep.subr.bf16.mxu0 0
    %668 = vmatpush1.bf16.msra.mxu0 0
    %669 = vmatprep.subr.bf16.mxu0 0
    %670 = vmatpush1.bf16.msra.mxu0 0
    %671 = vmatprep.subr.bf16.mxu0 0
    %672 = vmatpush1.bf16.msra.mxu0 0
    %673 = vmatprep.subr.bf16.mxu0 0
    %674 = vmatpush1.bf16.msra.mxu0 0
    %675 = vmatprep.subr.bf16.mxu0 0
    %676 = vmatpush1.bf16.msra.mxu0 0
    %677 = vmatprep.subr.bf16.mxu0 0
    %678 = vmatpush1.bf16.msra.mxu0 0
    %679 = vmatprep.subr.bf16.mxu0 0
    %680 = vmatpush1.bf16.msra.mxu0 0
    %681 = vmatprep.mubr.bf16.mxu0 0
    %682 = vmatmul.mubr.bf16.gmra.mrb[0].mxu0 %v524
    %v683 = vpop.f32.mrb[0].mxu0
    %v684 = vadd.f32 %v643, %v683
    %v685 = vpop.f32.mrb[0].mxu0
    %v686 = vpop.f32.mrb[0].mxu0
    %v687 = vadd.f32 %v646, %v686
    %v688 = vpop.f32.mrb[0].mxu0
    %689 = vdwg.mxu0
    %v690 = vmax.f32 %v684, 0.0
    %v691 = vmax.f32 %v687, 0.0
    %v692 = vpack.c.bf16 %v691, %v690
    %v693 = vld [vmem:[#allocation7] sm:$0xf]
    %v694 = vld [vmem:[#allocation7 + $0x4] sm:$0xf]
    %v695 = vld [vmem:[#allocation7 + $0x8] sm:$0xf]
    %v696 = vld [vmem:[#allocation7 + $0xc] sm:$0xf]
    %v697 = vld [vmem:[#allocation7 + $0x10] sm:$0xf]
    %v698 = vld [vmem:[#allocation7 + $0x14] sm:$0xf]
    %v699 = vld [vmem:[#allocation7 + $0x18] sm:$0xf]
    %v700 = vld [vmem:[#allocation7 + $0x1c] sm:$0xf]
    %v701 = vld [vmem:[#allocation7 + $0x20] sm:$0xf]
    %v702 = vld [vmem:[#allocation7 + $0x24] sm:$0xf]
    %v703 = vld [vmem:[#allocation7 + $0x28] sm:$0xf]
    %v704 = vld [vmem:[#allocation7 + $0x2c] sm:$0xf]
    %v705 = vld [vmem:[#allocation7 + $0x30] sm:$0xf]
    %v706 = vld [vmem:[#allocation7 + $0x34] sm:$0xf]
    %v707 = vld [vmem:[#allocation7 + $0x38] sm:$0xf]
    %v708 = vld [vmem:[#allocation7 + $0x3c] sm:$0xf]
    %v709 = vld [vmem:[%s4] sm:$0x1]
    %v711 = vlaneseq
    %v712 = vshrl.u32 %v711, 7
    %v713 = vsub.s32 0, %v712
    %v714 = vrot.slane %v709, %v713
    %v732 = vunpack.c.l.b16 %v693
    %v733 = vunpack.c.l.b16 %v694
    %v734 = vunpack.c.l.b16 %v695
    %v735 = vunpack.c.l.b16 %v696
    %v736 = vunpack.c.l.b16 %v697
    %v737 = vunpack.c.l.b16 %v698
    %v738 = vunpack.c.l.b16 %v699
    %v739 = vunpack.c.l.b16 %v700
    %v740 = vunpack.c.l.b16 %v701
    %v741 = vunpack.c.l.b16 %v702
    %v742 = vunpack.c.l.b16 %v703
    %v743 = vunpack.c.l.b16 %v704
    %v744 = vunpack.c.l.b16 %v705
    %v745 = vunpack.c.l.b16 %v706
    %v746 = vunpack.c.l.b16 %v707
    %v747 = vunpack.c.l.b16 %v708
    %v748 = vpack.c.b16 %v733, %v732
    %v749 = vpack.c.b16 %v735, %v734
    %v750 = vpack.c.b16 %v737, %v736
    %v751 = vpack.c.b16 %v739, %v738
    %v752 = vpack.c.b16 %v741, %v740
    %v753 = vpack.c.b16 %v743, %v742
    %v754 = vpack.c.b16 %v745, %v744
    %v755 = vpack.c.b16 %v747, %v746
    %764 = vmatprep.subr.bf16.mxu0 0
    %765 = vmatpush1.bf16.msra.mxu0 %v748
    %766 = vmatprep.subr.bf16.mxu0 0
    %767 = vmatpush1.bf16.msra.mxu0 %v749
    %768 = vmatprep.subr.bf16.mxu0 0
    %769 = vmatpush1.bf16.msra.mxu0 %v750
    %770 = vmatprep.subr.bf16.mxu0 0
    %771 = vmatpush1.bf16.msra.mxu0 %v751
    %772 = vmatprep.subr.bf16.mxu0 0
    %773 = vmatpush1.bf16.msra.mxu0 %v752
    %774 = vmatprep.subr.bf16.mxu0 0
    %775 = vmatpush1.bf16.msra.mxu0 %v753
    %776 = vmatprep.subr.bf16.mxu0 0
    %777 = vmatpush1.bf16.msra.mxu0 %v754
    %778 = vmatprep.subr.bf16.mxu0 0
    %779 = vmatpush1.bf16.msra.mxu0 %v755
    %780 = vmatprep.subr.bf16.mxu0 0
    %781 = vmatpush1.bf16.msra.mxu0 0
    %782 = vmatprep.subr.bf16.mxu0 0
    %783 = vmatpush1.bf16.msra.mxu0 0
    %784 = vmatprep.subr.bf16.mxu0 0
    %785 = vmatpush1.bf16.msra.mxu0 0
    %786 = vmatprep.subr.bf16.mxu0 0
    %787 = vmatpush1.bf16.msra.mxu0 0
    %788 = vmatprep.subr.bf16.mxu0 0
    %789 = vmatpush1.bf16.msra.mxu0 0
    %790 = vmatprep.subr.bf16.mxu0 0
    %791 = vmatpush1.bf16.msra.mxu0 0
    %792 = vmatprep.subr.bf16.mxu0 0
    %793 = vmatpush1.bf16.msra.mxu0 0
    %794 = vmatprep.subr.bf16.mxu0 0
    %795 = vmatpush1.bf16.msra.mxu0 0
    %796 = vmatprep.mubr.bf16.mxu0 0
    %797 = vmatmul.mubr.bf16.gmra.mrb[0].mxu0 %v692
    %v798 = vpop.f32.mrb[0].mxu0
    %v799 = vadd.f32 %v714, %v798
    %v800 = vpop.f32.mrb[0].mxu0
    %v801 = vpop.f32.mrb[0].mxu0
    %v802 = vadd.f32 %v714, %v801
    %v803 = vpop.f32.mrb[0].mxu0
    %804 = vdwg.mxu0
    %v805 = vmax.f32 %v799, 0.0
    %v806 = vmax.f32 %v802, 0.0
    %v807 = vpack.c.bf16 %v806, %v805
    %v808 = vld [vmem:[#allocation8] sm:$0xf]
    %v809 = vld [vmem:[#allocation8 + $0x4] sm:$0xf]
    %v810 = vld [vmem:[#allocation8 + $0x8] sm:$0xf]
    %v811 = vld [vmem:[#allocation8 + $0xc] sm:$0xf]
    %v812 = vld [vmem:[#allocation8 + $0x10] sm:$0xf]
    %v813 = vld [vmem:[#allocation8 + $0x14] sm:$0xf]
    %v814 = vld [vmem:[#allocation8 + $0x18] sm:$0xf]
    %v815 = vld [vmem:[#allocation8 + $0x1c] sm:$0xf]
    %v816 = vld [vmem:[#allocation8 + $0x20] sm:$0xf]
    %v817 = vld [vmem:[#allocation8 + $0x24] sm:$0xf]
    %v818 = vld [vmem:[#allocation8 + $0x28] sm:$0xf]
    %v819 = vld [vmem:[#allocation8 + $0x2c] sm:$0xf]
    %v820 = vld [vmem:[#allocation8 + $0x30] sm:$0xf]
    %v821 = vld [vmem:[#allocation8 + $0x34] sm:$0xf]
    %v822 = vld [vmem:[#allocation8 + $0x38] sm:$0xf]
    %v823 = vld [vmem:[#allocation8 + $0x3c] sm:$0xf]
    %v824 = vld [vmem:[%s6] sm:$0x1]
    %v826 = vlaneseq
    %v827 = vshrl.u32 %v826, 7
    %v828 = vsub.s32 0, %v827
    %v829 = vrot.slane %v824, %v828
    %v847 = vunpack.c.l.b16 %v808
    %v848 = vunpack.c.l.b16 %v809
    %v849 = vunpack.c.l.b16 %v810
    %v850 = vunpack.c.l.b16 %v811
    %v851 = vunpack.c.l.b16 %v812
    %v852 = vunpack.c.l.b16 %v813
    %v853 = vunpack.c.l.b16 %v814
    %v854 = vunpack.c.l.b16 %v815
    %v855 = vunpack.c.l.b16 %v816
    %v856 = vunpack.c.l.b16 %v817
    %v857 = vunpack.c.l.b16 %v818
    %v858 = vunpack.c.l.b16 %v819
    %v859 = vunpack.c.l.b16 %v820
    %v860 = vunpack.c.l.b16 %v821
    %v861 = vunpack.c.l.b16 %v822
    %v862 = vunpack.c.l.b16 %v823
    %v863 = vpack.c.b16 %v848, %v847
    %v864 = vpack.c.b16 %v850, %v849
    %v865 = vpack.c.b16 %v852, %v851
    %v866 = vpack.c.b16 %v854, %v853
    %v867 = vpack.c.b16 %v856, %v855
    %v868 = vpack.c.b16 %v858, %v857
    %v869 = vpack.c.b16 %v860, %v859
    %v870 = vpack.c.b16 %v862, %v861
    %879 = vmatprep.subr.bf16.mxu0 0
    %880 = vmatpush1.bf16.msra.mxu0 %v863
    %881 = vmatprep.subr.bf16.mxu0 0
    %882 = vmatpush1.bf16.msra.mxu0 %v864
    %883 = vmatprep.subr.bf16.mxu0 0
    %884 = vmatpush1.bf16.msra.mxu0 %v865
    %885 = vmatprep.subr.bf16.mxu0 0
    %886 = vmatpush1.bf16.msra.mxu0 %v866
    %887 = vmatprep.subr.bf16.mxu0 0
    %888 = vmatpush1.bf16.msra.mxu0 %v867
    %889 = vmatprep.subr.bf16.mxu0 0
    %890 = vmatpush1.bf16.msra.mxu0 %v868
    %891 = vmatprep.subr.bf16.mxu0 0
    %892 = vmatpush1.bf16.msra.mxu0 %v869
    %893 = vmatprep.subr.bf16.mxu0 0
    %894 = vmatpush1.bf16.msra.mxu0 %v870
    %895 = vmatprep.subr.bf16.mxu0 0
    %896 = vmatpush1.bf16.msra.mxu0 0
    %897 = vmatprep.subr.bf16.mxu0 0
    %898 = vmatpush1.bf16.msra.mxu0 0
    %899 = vmatprep.subr.bf16.mxu0 0
    %900 = vmatpush1.bf16.msra.mxu0 0
    %901 = vmatprep.subr.bf16.mxu0 0
    %902 = vmatpush1.bf16.msra.mxu0 0
    %903 = vmatprep.subr.bf16.mxu0 0
    %904 = vmatpush1.bf16.msra.mxu0 0
    %905 = vmatprep.subr.bf16.mxu0 0
    %906 = vmatpush1.bf16.msra.mxu0 0
    %907 = vmatprep.subr.bf16.mxu0 0
    %908 = vmatpush1.bf16.msra.mxu0 0
    %909 = vmatprep.subr.bf16.mxu0 0
    %910 = vmatpush1.bf16.msra.mxu0 0
    %911 = vmatprep.mubr.bf16.mxu0 0
    %912 = vmatmul.mubr.bf16.gmra.mrb[0].mxu0 %v807
    %v913 = vpop.f32.mrb[0].mxu0
    %v914 = vadd.f32 %v829, %v913
    %v915 = vpop.f32.mrb[0].mxu0
    %v916 = vpop.f32.mrb[0].mxu0
    %v917 = vadd.f32 %v829, %v916
    %v918 = vpop.f32.mrb[0].mxu0
    %919 = vdwg.mxu0
    %v920 = vmax.f32 %v914, 0.0
    %v921 = vmax.f32 %v917, 0.0
    %v922 = vpack.c.bf16 %v921, %v920
    %v923 = vld [vmem:[#allocation10] sm:$0xf]
    %v924 = vld [vmem:[#allocation10 + $0x4] sm:$0xf]
    %v925 = vld [vmem:[#allocation10 + $0x8] sm:$0xf]
    %v926 = vld [vmem:[#allocation10 + $0xc] sm:$0xf]
    %v927 = vld [vmem:[#allocation10 + $0x10] sm:$0xf]
    %v928 = vld [vmem:[#allocation10 + $0x14] sm:$0xf]
    %v929 = vld [vmem:[#allocation10 + $0x18] sm:$0xf]
    %v930 = vld [vmem:[#allocation10 + $0x1c] sm:$0xf]
    %v931 = vld [vmem:[#allocation10 + $0x20] sm:$0xf]
    %v932 = vld [vmem:[#allocation10 + $0x24] sm:$0xf]
    %v933 = vld [vmem:[#allocation10 + $0x28] sm:$0xf]
    %v934 = vld [vmem:[#allocation10 + $0x2c] sm:$0xf]
    %v935 = vld [vmem:[#allocation10 + $0x30] sm:$0xf]
    %v936 = vld [vmem:[#allocation10 + $0x34] sm:$0xf]
    %v937 = vld [vmem:[#allocation10 + $0x38] sm:$0xf]
    %v938 = vld [vmem:[#allocation10 + $0x3c] sm:$0xf]
    %v939 = vld [vmem:[%s8] sm:$0x1]
    %v941 = vlaneseq
    %v942 = vshrl.u32 %v941, 7
    %v943 = vsub.s32 0, %v942
    %v944 = vrot.slane %v939, %v943
    %v962 = vunpack.c.l.b16 %v923
    %v963 = vunpack.c.l.b16 %v924
    %v964 = vunpack.c.l.b16 %v925
    %v965 = vunpack.c.l.b16 %v926
    %v966 = vunpack.c.l.b16 %v927
    %v967 = vunpack.c.l.b16 %v928
    %v968 = vunpack.c.l.b16 %v929
    %v969 = vunpack.c.l.b16 %v930
    %v970 = vunpack.c.l.b16 %v931
    %v971 = vunpack.c.l.b16 %v932
    %v972 = vunpack.c.l.b16 %v933
    %v973 = vunpack.c.l.b16 %v934
    %v974 = vunpack.c.l.b16 %v935
    %v975 = vunpack.c.l.b16 %v936
    %v976 = vunpack.c.l.b16 %v937
    %v977 = vunpack.c.l.b16 %v938
    %v978 = vpack.c.b16 %v963, %v962
    %v979 = vpack.c.b16 %v965, %v964
    %v980 = vpack.c.b16 %v967, %v966
    %v981 = vpack.c.b16 %v969, %v968
    %v982 = vpack.c.b16 %v971, %v970
    %v983 = vpack.c.b16 %v973, %v972
    %v984 = vpack.c.b16 %v975, %v974
    %v985 = vpack.c.b16 %v977, %v976
    %994 = vmatprep.subr.bf16.mxu0 0
    %995 = vmatpush1.bf16.msra.mxu0 %v978
    %996 = vmatprep.subr.bf16.mxu0 0
    %997 = vmatpush1.bf16.msra.mxu0 %v979
    %998 = vmatprep.subr.bf16.mxu0 0
    %999 = vmatpush1.bf16.msra.mxu0 %v980
    %1000 = vmatprep.subr.bf16.mxu0 0
    %1001 = vmatpush1.bf16.msra.mxu0 %v981
    %1002 = vmatprep.subr.bf16.mxu0 0
    %1003 = vmatpush1.bf16.msra.mxu0 %v982
    %1004 = vmatprep.subr.bf16.mxu0 0
    %1005 = vmatpush1.bf16.msra.mxu0 %v983
    %1006 = vmatprep.subr.bf16.mxu0 0
    %1007 = vmatpush1.bf16.msra.mxu0 %v984
    %1008 = vmatprep.subr.bf16.mxu0 0
    %1009 = vmatpush1.bf16.msra.mxu0 %v985
    %1010 = vmatprep.subr.bf16.mxu0 0
    %1011 = vmatpush1.bf16.msra.mxu0 0
    %1012 = vmatprep.subr.bf16.mxu0 0
    %1013 = vmatpush1.bf16.msra.mxu0 0
    %1014 = vmatprep.subr.bf16.mxu0 0
    %1015 = vmatpush1.bf16.msra.mxu0 0
    %1016 = vmatprep.subr.bf16.mxu0 0
    %1017 = vmatpush1.bf16.msra.mxu0 0
    %1018 = vmatprep.subr.bf16.mxu0 0
    %1019 = vmatpush1.bf16.msra.mxu0 0
    %1020 = vmatprep.subr.bf16.mxu0 0
    %1021 = vmatpush1.bf16.msra.mxu0 0
    %1022 = vmatprep.subr.bf16.mxu0 0
    %1023 = vmatpush1.bf16.msra.mxu0 0
    %1024 = vmatprep.subr.bf16.mxu0 0
    %1025 = vmatpush1.bf16.msra.mxu0 0
    %1026 = vmatprep.mubr.bf16.mxu0 0
    %1027 = vmatmul.mubr.bf16.gmra.mrb[0].mxu0 %v922
    %v1028 = vpop.f32.mrb[0].mxu0
    %v1029 = vadd.f32 %v944, %v1028
    %v1030 = vpop.f32.mrb[0].mxu0
    %v1031 = vpop.f32.mrb[0].mxu0
    %v1032 = vadd.f32 %v944, %v1031
    %v1033 = vpop.f32.mrb[0].mxu0
    %1034 = vdwg.mxu0
    %v1035 = vlaneseq
    %v1036 = vand.u32 %v1035, 127
    %vm1037 = vcmp.lt.s32.totalorder %v1036, 10
    %v1038 = vsel %vm1037, %v1029, -1e+30
    %v1039 = vsel %vm1037, %v1032, -1e+30
    %1040 = vmax.xlane.f32.xlu0 %v1038
    %v1041 = vpop.xlane.xlu0 %1040
    %1042 = vmax.xlane.f32.xlu0 %v1039
    %v1043 = vpop.xlane.xlu0 %1042
    %v1044 = vsub.f32 %v1038, %v1041
    %v1045 = vsub.f32 %v1039, %v1043
    %v1046 = vmul.f32 %v1044, 1.442695
    %v1047 = vpow.pop %v1046
    %v1048 = vmul.f32 %v1045, 1.442695
    %v1049 = vpow.pop %v1048
    %1050 = vadd.xlane.f32.xlu0 %v1047
    %v1051 = vpop.xlane.xlu0 %1050
    %1052 = vadd.xlane.f32.xlu0 %v1049
    %v1053 = vpop.xlane.xlu0 %1052
    %v1054 = vlog2.pop %v1051
    %v1055 = vmul.f32 %v1054, 0.6931472
    %v1056 = vlog2.pop %v1053
    %v1057 = vmul.f32 %v1056, 0.6931472
    %v1058 = vsub.f32 %v1044, %v1055
    %v1059 = vsub.f32 %v1045, %v1057
    %v1060 = vpack.c.bf16 %v1059, %v1058
    %v1062 = vunpack.c.l.b16 %v1060
    %v1063 = vunpack.c.h.b16 %v1060
    %v1064 = vpack.c.b16 %v1062, %v1062
    %v1065 = vpack.c.b16 %v1063, %v1063
    %1068 = vst [vmem:[#allocation11] sm:$0xf] %v1064
    %1069 = vst [vmem:[#allocation11 + $0x4] sm:$0xf] %v1065
    // Predicated region
    $region58: #{tpu_custom_call.1} parent=1 // pred_check
      _
    $region59: #{tpu_custom_call.1} parent=1 // pred_check_branch
      %1071 = sbr.rel (0) target = $region61
    $region60: #{tpu_custom_call.1} parent=1 // pred_region
      %s1073 = ssub.s32 128, 64
      %1074 = vsyncadd [#allocation4], %s1073
      %s1075 = sshll.u32 [#allocation11], 4
      %s1076 = int_to_ptr.vmem [resolvable:$true] %s1075
      %1081 = dma.vmem_to_hbm [thread:$0]  %s1076, 64, %s9, [#allocation4], 64, 64, 4
    $region61: #{tpu_custom_call.1} parent=1 // pred_fallthru
      _
    // Predicated region
    $region62: #{tpu_custom_call.1} parent=1 // pred_check
      _
    $region63: #{tpu_custom_call.1} parent=1 // pred_check_branch
      %1083 = sbr.rel (0) target = $region65
    $region64: #{tpu_custom_call.1} parent=1 // pred_region
      %1084 = dma.done [#allocation4], 128
    $region65: #{tpu_custom_call.1} parent=1 // pred_fallthru
      _
    %1085 = vsyncpa [#allocation3], 1
    %1086 = vsyncpa [#allocation6], 1
    %1087 = vsyncpa [#allocation9], 1
    %1088 = vsyncpa [#allocation4], 1

</llo_original>
